<compile_context>
chip_gen: v6e
topology: v6e:2x2x1
jax: 0.10.0
libtpu: 0.0.40
codegen_flags: <defaults>
</compile_context>

<pallas_src>
import functools

import jax
import jax.numpy as jnp
from jax.experimental import pallas as pl
from jax.experimental.pallas import tpu as pltpu


def _round_up(x, m):
    return (x + m - 1) // m * m


# ---------------------------------------------------------------------------
# Kernel: fused multi-timestep LSTM scan with VMEM-resident weights and state.
# ---------------------------------------------------------------------------
def _lstm_scan_kernel(x_ref, c0_ref, h0_ref, wx_ref, wh_ref, b_ref,
                      c_out_ref, h_out_ref, c_sc, h_sc, *, n_out_pad):
    t = pl.program_id(0)

    # Initialize the VMEM-resident state on the first timestep.
    @pl.when(t == 0)
    def _():
        c_sc[...] = c0_ref[...]
        h_sc[...] = h0_ref[...]

    x = x_ref[0]            # [B_pad, n_in_pad]
    h_prev = h_sc[...]      # [B_pad, n_out_pad]
    c_prev = c_sc[...]      # [B_pad, n_out_pad]

    # Fused gate pre-activations: [B_pad, 4*n_out_pad], gates at 128-aligned lanes.
    z = (
        jnp.dot(x, wx_ref[...], preferred_element_type=jnp.float32)
        + jnp.dot(h_prev, wh_ref[...], preferred_element_type=jnp.float32)
        + b_ref[...]
    )

    p = n_out_pad
    f = jax.nn.sigmoid(z[:, 0 * p:1 * p])
    i = jax.nn.sigmoid(z[:, 1 * p:2 * p])
    o = jax.nn.sigmoid(z[:, 2 * p:3 * p])
    g = jnp.tanh(z[:, 3 * p:4 * p])

    c = f * c_prev + i * g
    h = o * jnp.tanh(c)

    c_sc[...] = c
    h_sc[...] = h

    # Write the (lane-dense, VMEM-resident) outputs once, on the last step.
    @pl.when(t == pl.num_programs(0) - 1)
    def _():
        c_out_ref[...] = c
        h_out_ref[...] = h


def lstm_scan_pallas(x_seq, c0, h0, kernel_params):
    """Run the LSTM cell over a sequence inside a single pallas_call.

    x_seq : [T, B, n_in]  float32
    c0,h0 : [B, n_out]    float32
    returns (c_T, h_T) each [B, n_out] — the state after the last timestep.
    """
    wx = kernel_params["wx"]          # [n_in_pad, 4*n_out_pad]
    wh = kernel_params["wh"]          # [n_out_pad, 4*n_out_pad]
    b = kernel_params["b"]            # [1, 4*n_out_pad]

    T, B, n_in = x_seq.shape
    n_out = c0.shape[-1]
    n_in_pad = wx.shape[0]
    n_out_pad = wh.shape[0]
    b_pad = _round_up(B, 8)

    # Zero-padded, lane/sublane-aligned host-side layouts (done once per call).
    x_p = jnp.zeros((T, b_pad, n_in_pad), jnp.float32).at[:, :B, :n_in].set(x_seq)
    c0_p = jnp.zeros((b_pad, n_out_pad), jnp.float32).at[:B, :n_out].set(c0)
    h0_p = jnp.zeros((b_pad, n_out_pad), jnp.float32).at[:B, :n_out].set(h0)

    kernel = functools.partial(_lstm_scan_kernel, n_out_pad=n_out_pad)

    c_p, h_p = pl.pallas_call(
        kernel,
        out_shape=(
            jax.ShapeDtypeStruct((b_pad, n_out_pad), jnp.float32),
            jax.ShapeDtypeStruct((b_pad, n_out_pad), jnp.float32),
        ),
        grid_spec=pltpu.PrefetchScalarGridSpec(
            num_scalar_prefetch=0,
            grid=(T,),
            in_specs=[
                pl.BlockSpec((1, b_pad, n_in_pad), lambda t: (t, 0, 0)),    # x_t
                pl.BlockSpec((b_pad, n_out_pad), lambda t: (0, 0)),         # c0
                pl.BlockSpec((b_pad, n_out_pad), lambda t: (0, 0)),         # h0
                pl.BlockSpec((n_in_pad, 4 * n_out_pad), lambda t: (0, 0)),  # Wx (resident)
                pl.BlockSpec((n_out_pad, 4 * n_out_pad), lambda t: (0, 0)), # Wh (resident)
                pl.BlockSpec((1, 4 * n_out_pad), lambda t: (0, 0)),         # b  (resident)
            ],
            out_specs=(
                pl.BlockSpec((b_pad, n_out_pad), lambda t: (0, 0)),
                pl.BlockSpec((b_pad, n_out_pad), lambda t: (0, 0)),
            ),
            scratch_shapes=[
                pltpu.VMEM((b_pad, n_out_pad), jnp.float32),  # c state
                pltpu.VMEM((b_pad, n_out_pad), jnp.float32),  # h state
            ],
        ),
        compiler_params=pltpu.CompilerParams(
            dimension_semantics=("arbitrary",),  # time is a true recurrence
        ),
    )(x_p, c0_p, h0_p, wx, wh, b)

    return c_p[:B, :n_out], h_p[:B, :n_out]


# ---------------------------------------------------------------------------
# Parameters: four nn.Linear(n_in+n_out, n_out) per mode, fused & lane-aligned.
# ---------------------------------------------------------------------------
def _pack_kernel_params(w, b, n_in, n_out):
    """w: [4, n_out, n_in+n_out] (torch Linear layout, gate order f,i,o,g); b: [4, n_out].

    Produces split/transposed/zero-padded weights with each gate occupying its own
    128-lane-aligned column block so in-kernel gate slices are vreg-aligned."""
    n_in_pad = _round_up(n_in, 128)
    n_out_pad = _round_up(n_out, 128)
    wx = jnp.zeros((n_in_pad, 4 * n_out_pad), jnp.float32)
    wh = jnp.zeros((n_out_pad, 4 * n_out_pad), jnp.float32)
    bp = jnp.zeros((1, 4 * n_out_pad), jnp.float32)
    for g in range(4):
        col = g * n_out_pad
        wx = wx.at[:n_in, col:col + n_out].set(w[g, :, :n_in].T)
        wh = wh.at[:n_out, col:col + n_out].set(w[g, :, n_in:].T)
        bp = bp.at[0, col:col + n_out].set(b[g])
    return {"wx": wx, "wh": wh, "b": bp}


def init_mylstm_params(key, n_in, n_out):
    """Deterministic synthetic params mimicking torch Linear default init."""
    d = n_in + n_out
    bound = float(1.0 / (d ** 0.5))
    params = {}
    for mode in ("encode", "decode"):
        key, kw, kb = jax.random.split(key, 3)
        w = jax.random.uniform(kw, (4, n_out, d), jnp.float32, -bound, bound)
        b = jax.random.uniform(kb, (4, n_out), jnp.float32, -bound, bound)
        params[mode] = {
            "raw": {"w": w, "b": b},
            "kernel": _pack_kernel_params(w, b, n_in, n_out),
        }
    return params


# ---------------------------------------------------------------------------
# Public entry points matching the PyTorch module semantics.
# ---------------------------------------------------------------------------
def mylstm_forward(params, c_old, h_old, x, mode):
    """Exact equivalent of MyLSTM.forward(c_old, h_old, x, mode): one unbatched step."""
    c, h = lstm_scan_pallas(x[None, None, :], c_old[None, :], h_old[None, :],
                            params[mode]["kernel"])
    return c[0], h[0]


def mylstm_scan(params, c0, h0, x_seq, mode):
    """Batched multi-timestep application of the same cell (fused in one kernel)."""
    return lstm_scan_pallas(x_seq, c0, h0, params[mode]["kernel"])


# ---------------------------------------------------------------------------
# Pure-JAX references reproducing the PyTorch math.
# ---------------------------------------------------------------------------
def _reference_step(raw, c_old, h_old, x):
    xh = jnp.concatenate([x, h_old], axis=-1)
    zs = [xh @ raw["w"][g].T + raw["b"][g] for g in range(4)]
    f = jax.nn.sigmoid(zs[0])
    i = jax.nn.sigmoid(zs[1])
    o = jax.nn.sigmoid(zs[2])
    g = jnp.tanh(zs[3])
    c = f * c_old + i * g
    h = o * jnp.tanh(c)
    return c, h


def _reference_scan(raw, c0, h0, x_seq):
    c, h = c0, h0
    for t in range(x_seq.shape[0]):
        c, h = _reference_step(raw, c, h, x_seq[t])
    return c, h


if __name__ == "__main__":
    n_in, n_out = 16, 32
    B, T = 8, 8

    key = jax.random.PRNGKey(0)
    kp, kc, kh, kx = jax.random.split(key, 4)

    params = init_mylstm_params(kp, n_in, n_out)
    c0 = jax.random.normal(kc, (B, n_out), jnp.float32)
    h0 = jax.random.normal(kh, (B, n_out), jnp.float32)
    x_seq = jax.random.normal(kx, (T, B, n_in), jnp.float32)

    ok = True
    for mode in ("encode", "decode"):
        # Fused batched multi-timestep scan (the optimized path).
        c_T, h_T = mylstm_scan(params, c0, h0, x_seq, mode)
        c_T, h_T = jax.block_until_ready(c_T), jax.block_until_ready(h_T)
        c_ref, h_ref = _reference_scan(params[mode]["raw"], c0, h0, x_seq)
        ok &= bool(jnp.allclose(c_T, c_ref, atol=1e-5, rtol=1e-5))
        ok &= bool(jnp.allclose(h_T, h_ref, atol=1e-5, rtol=1e-5))

        # Single-step, unbatched call: matches MyLSTM.forward exactly.
        c1, h1 = mylstm_forward(params, c0[0], h0[0], x_seq[0, 0], mode)
        c1, h1 = jax.block_until_ready(c1), jax.block_until_ready(h1)
        c1_ref, h1_ref = _reference_step(params[mode]["raw"], c0[0], h0[0], x_seq[0, 0])
        ok &= bool(jnp.allclose(c1, c1_ref, atol=1e-5, rtol=1e-5))
        ok &= bool(jnp.allclose(h1, h1_ref, atol=1e-5, rtol=1e-5))

    print("KERNEL_OK" if ok else "KERNEL_MISMATCH")
</pallas_src>

<mosaic_0001>
module attributes {stable_mosaic.version = 11 : i64} {
  func.func @_lstm_scan_kernel(%arg0: i32, %arg1: memref<1x8x128xf32, #tpu.memory_space<vmem>>, %arg2: memref<8x128xf32, #tpu.memory_space<vmem>>, %arg3: memref<8x128xf32, #tpu.memory_space<vmem>>, %arg4: memref<128x512xf32, #tpu.memory_space<vmem>>, %arg5: memref<128x512xf32, #tpu.memory_space<vmem>>, %arg6: memref<1x512xf32, #tpu.memory_space<vmem>>, %arg7: memref<8x128xf32, #tpu.memory_space<vmem>>, %arg8: memref<8x128xf32, #tpu.memory_space<vmem>>, %arg9: memref<8x128xf32, #tpu.memory_space<vmem>>, %arg10: memref<8x128xf32, #tpu.memory_space<vmem>>) attributes {dimension_semantics = [#tpu.dimension_semantics<arbitrary>], iteration_bounds = array<i64: 8>, scalar_prefetch = 0 : i64, scratch_operands = 2 : i64, tpu.core_type = #tpu.core_type<tc>, window_params = [{transform_indices = @transform_0, window_bounds = array<i64: 1, 8, 128>}, {pipeline_mode = #tpu.pipeline_mode<synchronous>, transform_indices = @transform_1, window_bounds = array<i64: 8, 128>}, {pipeline_mode = #tpu.pipeline_mode<synchronous>, transform_indices = @transform_2, window_bounds = array<i64: 8, 128>}, {pipeline_mode = #tpu.pipeline_mode<synchronous>, transform_indices = @transform_3, window_bounds = array<i64: 128, 512>}, {pipeline_mode = #tpu.pipeline_mode<synchronous>, transform_indices = @transform_4, window_bounds = array<i64: 128, 512>}, {pipeline_mode = #tpu.pipeline_mode<synchronous>, transform_indices = @transform_5, window_bounds = array<i64: 1, 512>}, {pipeline_mode = #tpu.pipeline_mode<synchronous>, transform_indices = @transform_6, window_bounds = array<i64: 8, 128>}, {pipeline_mode = #tpu.pipeline_mode<synchronous>, transform_indices = @transform_7, window_bounds = array<i64: 8, 128>}]} {
    %c0_i32 = arith.constant 0 : i32
    %0 = arith.cmpi eq, %arg0, %c0_i32 : i32
    %1 = arith.extui %0 : i1 to i32
    %c0_i32_0 = arith.constant 0 : i32
    %2 = arith.cmpi ne, %1, %c0_i32_0 : i32
    scf.if %2 {
      %c0_22 = arith.constant 0 : index
      %c0_23 = arith.constant 0 : index
      %45 = vector.load %arg2[%c0_22, %c0_23] : memref<8x128xf32, #tpu.memory_space<vmem>>, vector<8x128xf32>
      %c0_24 = arith.constant 0 : index
      %c0_25 = arith.constant 0 : index
      %46 = vector.load %arg9[%c0_24, %c0_25] : memref<8x128xf32, #tpu.memory_space<vmem>>, vector<8x128xf32>
      tpu.vector_store %arg9[%c0_24, %c0_25], %45 {strides = array<i32>} : memref<8x128xf32, #tpu.memory_space<vmem>>, vector<8x128xf32>,
      %c0_26 = arith.constant 0 : index
      %c0_27 = arith.constant 0 : index
      %47 = vector.load %arg3[%c0_26, %c0_27] : memref<8x128xf32, #tpu.memory_space<vmem>>, vector<8x128xf32>
      %c0_28 = arith.constant 0 : index
      %c0_29 = arith.constant 0 : index
      %48 = vector.load %arg10[%c0_28, %c0_29] : memref<8x128xf32, #tpu.memory_space<vmem>>, vector<8x128xf32>
      tpu.vector_store %arg10[%c0_28, %c0_29], %47 {strides = array<i32>} : memref<8x128xf32, #tpu.memory_space<vmem>>, vector<8x128xf32>,
    } else {
    }
    %c0 = arith.constant 0 : index
    %c0_1 = arith.constant 0 : index
    %c0_2 = arith.constant 0 : index
    %3 = vector.load %arg1[%c0, %c0_1, %c0_2] : memref<1x8x128xf32, #tpu.memory_space<vmem>>, vector<1x8x128xf32>
    %4 = vector.shape_cast %3 : vector<1x8x128xf32> to vector<8x128xf32>
    %c0_3 = arith.constant 0 : index
    %c0_4 = arith.constant 0 : index
    %5 = vector.load %arg10[%c0_3, %c0_4] : memref<8x128xf32, #tpu.memory_space<vmem>>, vector<8x128xf32>
    %c0_5 = arith.constant 0 : index
    %c0_6 = arith.constant 0 : index
    %6 = vector.load %arg9[%c0_5, %c0_6] : memref<8x128xf32, #tpu.memory_space<vmem>>, vector<8x128xf32>
    %c0_7 = arith.constant 0 : index
    %c0_8 = arith.constant 0 : index
    %7 = vector.load %arg4[%c0_7, %c0_8] : memref<128x512xf32, #tpu.memory_space<vmem>>, vector<128x512xf32>
    %cst = arith.constant dense<0.000000e+00> : vector<8x512xf32>
    %8 = tpu.matmul %4, %7, %cst {dimension_numbers = #tpu.dot_dimension_numbers<[1], [0], [0], [1], [0, 0, 1, 1], [], []>} : vector<8x128xf32>, vector<128x512xf32>, vector<8x512xf32> -> vector<8x512xf32>
    %c0_9 = arith.constant 0 : index
    %c0_10 = arith.constant 0 : index
    %9 = vector.load %arg5[%c0_9, %c0_10] : memref<128x512xf32, #tpu.memory_space<vmem>>, vector<128x512xf32>
    %cst_11 = arith.constant dense<0.000000e+00> : vector<8x512xf32>
    %10 = tpu.matmul %5, %9, %cst_11 {dimension_numbers = #tpu.dot_dimension_numbers<[1], [0], [0], [1], [0, 0, 1, 1], [], []>} : vector<8x128xf32>, vector<128x512xf32>, vector<8x512xf32> -> vector<8x512xf32>
    %11 = arith.addf %8, %10 : vector<8x512xf32>
    %c0_12 = arith.constant 0 : index
    %c0_13 = arith.constant 0 : index
    %12 = vector.load %arg6[%c0_12, %c0_13] : memref<1x512xf32, #tpu.memory_space<vmem>>, vector<1x512xf32>
    %13 = vector.broadcast %12 : vector<1x512xf32> to vector<8x512xf32>
    %14 = arith.addf %11, %13 : vector<8x512xf32>
    %15 = vector.extract_strided_slice %14 {offsets = [0, 0], sizes = [8, 128], strides = [1, 1]} : vector<8x512xf32> to vector<8x128xf32>
    %16 = arith.negf %15 : vector<8x128xf32>
    %17 = math.exp %16 : vector<8x128xf32>
    %cst_14 = arith.constant 1.000000e+00 : f32
    %18 = vector.broadcast %cst_14 : f32 to vector<8x128xf32>
    %19 = arith.addf %18, %17 : vector<8x128xf32>
    %20 = arith.divf %18, %19 : vector<8x128xf32>
    %21 = vector.extract_strided_slice %14 {offsets = [0, 128], sizes = [8, 128], strides = [1, 1]} : vector<8x512xf32> to vector<8x128xf32>
    %22 = arith.negf %21 : vector<8x128xf32>
    %23 = math.exp %22 : vector<8x128xf32>
    %cst_15 = arith.constant 1.000000e+00 : f32
    %24 = vector.broadcast %cst_15 : f32 to vector<8x128xf32>
    %25 = arith.addf %24, %23 : vector<8x128xf32>
    %26 = arith.divf %24, %25 : vector<8x128xf32>
    %27 = vector.extract_strided_slice %14 {offsets = [0, 256], sizes = [8, 128], strides = [1, 1]} : vector<8x512xf32> to vector<8x128xf32>
    %28 = arith.negf %27 : vector<8x128xf32>
    %29 = math.exp %28 : vector<8x128xf32>
    %cst_16 = arith.constant 1.000000e+00 : f32
    %30 = vector.broadcast %cst_16 : f32 to vector<8x128xf32>
    %31 = arith.addf %30, %29 : vector<8x128xf32>
    %32 = arith.divf %30, %31 : vector<8x128xf32>
    %33 = vector.extract_strided_slice %14 {offsets = [0, 384], sizes = [8, 128], strides = [1, 1]} : vector<8x512xf32> to vector<8x128xf32>
    %34 = math.tanh %33 : vector<8x128xf32>
    %35 = arith.mulf %20, %6 : vector<8x128xf32>
    %36 = arith.mulf %26, %34 : vector<8x128xf32>
    %37 = arith.addf %35, %36 : vector<8x128xf32>
    %38 = math.tanh %37 : vector<8x128xf32>
    %39 = arith.mulf %32, %38 : vector<8x128xf32>
    %c0_17 = arith.constant 0 : index
    %c0_18 = arith.constant 0 : index
    %40 = vector.load %arg9[%c0_17, %c0_18] : memref<8x128xf32, #tpu.memory_space<vmem>>, vector<8x128xf32>
    tpu.vector_store %arg9[%c0_17, %c0_18], %37 {strides = array<i32>} : memref<8x128xf32, #tpu.memory_space<vmem>>, vector<8x128xf32>,
    %c0_19 = arith.constant 0 : index
    %c0_20 = arith.constant 0 : index
    %41 = vector.load %arg10[%c0_19, %c0_20] : memref<8x128xf32, #tpu.memory_space<vmem>>, vector<8x128xf32>
    tpu.vector_store %arg10[%c0_19, %c0_20], %39 {strides = array<i32>} : memref<8x128xf32, #tpu.memory_space<vmem>>, vector<8x128xf32>,
    %c7_i32 = arith.constant 7 : i32
    %42 = arith.cmpi eq, %arg0, %c7_i32 : i32
    %43 = arith.extui %42 : i1 to i32
    %c0_i32_21 = arith.constant 0 : i32
    %44 = arith.cmpi ne, %43, %c0_i32_21 : i32
    scf.if %44 {
      %c0_22 = arith.constant 0 : index
      %c0_23 = arith.constant 0 : index
      %45 = vector.load %arg7[%c0_22, %c0_23] : memref<8x128xf32, #tpu.memory_space<vmem>>, vector<8x128xf32>
      tpu.vector_store %arg7[%c0_22, %c0_23], %37 {strides = array<i32>} : memref<8x128xf32, #tpu.memory_space<vmem>>, vector<8x128xf32>,
      %c0_24 = arith.constant 0 : index
      %c0_25 = arith.constant 0 : index
      %46 = vector.load %arg8[%c0_24, %c0_25] : memref<8x128xf32, #tpu.memory_space<vmem>>, vector<8x128xf32>
      tpu.vector_store %arg8[%c0_24, %c0_25], %39 {strides = array<i32>} : memref<8x128xf32, #tpu.memory_space<vmem>>, vector<8x128xf32>,
    } else {
    }
    return
  }
  func.func @transform_0(%arg0: i32) -> (i32, i32, i32) {
    %c0_i32 = arith.constant 0 : i32
    %c0_i32_0 = arith.constant 0 : i32
    %c0_i32_1 = arith.constant 0 : i32
    return %arg0, %c0_i32, %c0_i32_0 : i32, i32, i32
  }
  func.func @transform_1(%arg0: i32) -> (i32, i32) {
    %c0_i32 = arith.constant 0 : i32
    %c0_i32_0 = arith.constant 0 : i32
    %c0_i32_1 = arith.constant 0 : i32
    return %c0_i32, %c0_i32_0 : i32, i32
  }
  func.func @transform_2(%arg0: i32) -> (i32, i32) {
    %c0_i32 = arith.constant 0 : i32
    %c0_i32_0 = arith.constant 0 : i32
    %c0_i32_1 = arith.constant 0 : i32
    return %c0_i32, %c0_i32_0 : i32, i32
  }
  func.func @transform_3(%arg0: i32) -> (i32, i32) {
    %c0_i32 = arith.constant 0 : i32
    %c0_i32_0 = arith.constant 0 : i32
    %c0_i32_1 = arith.constant 0 : i32
    return %c0_i32, %c0_i32_0 : i32, i32
  }
  func.func @transform_4(%arg0: i32) -> (i32, i32) {
    %c0_i32 = arith.constant 0 : i32
    %c0_i32_0 = arith.constant 0 : i32
    %c0_i32_1 = arith.constant 0 : i32
    return %c0_i32, %c0_i32_0 : i32, i32
  }
  func.func @transform_5(%arg0: i32) -> (i32, i32) {
    %c0_i32 = arith.constant 0 : i32
    %c0_i32_0 = arith.constant 0 : i32
    %c0_i32_1 = arith.constant 0 : i32
    return %c0_i32, %c0_i32_0 : i32, i32
  }
  func.func @transform_6(%arg0: i32) -> (i32, i32) {
    %c0_i32 = arith.constant 0 : i32
    %c0_i32_0 = arith.constant 0 : i32
    %c0_i32_1 = arith.constant 0 : i32
    return %c0_i32, %c0_i32_0 : i32, i32
  }
  func.func @transform_7(%arg0: i32) -> (i32, i32) {
    %c0_i32 = arith.constant 0 : i32
    %c0_i32_0 = arith.constant 0 : i32
    %c0_i32_1 = arith.constant 0 : i32
    return %c0_i32, %c0_i32_0 : i32, i32
  }
}

</mosaic_0001>

<llo_original>
// kernel: tpu_custom_call.1
$region0: #{tpu_custom_call.1}
  #allocation0 [shape = 'u32[]', space=smem, size = 0x4, offset = 0x4, fixed_abs, tag = 'smem constant byte address 0x4 - core index']
  #allocation1 [shape = 'u32[144,128]{1,0:T(1,128)}', space=vmem, size = 0x12000, scoped, tag = 'internal scratch']
  #allocation2 [shape = 'f32[8,128]{1,0:T(8,128)}', space=vmem, size = 0x1000, scoped, tag = 'scratch operand']
  #allocation3 [shape = 'f32[8,128]{1,0:T(8,128)}', space=vmem, size = 0x1000, scoped, tag = 'scratch operand']
  %s0 = inlined_call_operand.hbm [shape: f32[8,8,128], index: 0, kind: input, shape index: {}]
  %s1 = inlined_call_operand.hbm [shape: f32[8,128], index: 1, kind: input, shape index: {}]
  %s2 = inlined_call_operand.hbm [shape: f32[8,128], index: 2, kind: input, shape index: {}]
  %s3 = inlined_call_operand.hbm [shape: f32[128,512], index: 3, kind: input, shape index: {}]
  %s4 = inlined_call_operand.hbm [shape: f32[128,512], index: 4, kind: input, shape index: {}]
  %s5 = inlined_call_operand.vmem [shape: f32[1,512], index: 5, kind: input, shape index: {}]
  %s6 = inlined_call_operand.hbm [shape: f32[8,128], index: 6, kind: output, shape index: {0}]
  %s7 = inlined_call_operand.hbm [shape: f32[8,128], index: 7, kind: output, shape index: {1}]
  %8 = xla_tuple %s6, %s7
  %s9 = sld [smem:[#allocation0]]
  $region93: #{tpu_custom_call.1} parent=0
    _
  %s11 = ssub.s32 1, %s9
  %s12 = scalar_select 0, %s11, %s9
  $region1: #{tpu_custom_call.1} parent=0
    #allocation4 [shape = 'u8[8192]{0}', space=vmem, size = 0x2000, scoped, tag = 'input window, operand 0']
    #allocation5 [shape = 's32[2]{0}', space=sflag, size = 0x8, scoped, tag = 'scoped memory for tpu_custom_call.1']
    #allocation6 [shape = 's32[2]{0}', space=sflag, size = 0x8, scoped, tag = 'scoped memory for tpu_custom_call.1']
    #allocation7 [shape = 'u8[4096]{0}', space=vmem, size = 0x1000, scoped, tag = 'input window, operand 1, single buffered']
    #allocation8 [shape = 's32[1]{0}', space=sflag, size = 0x4, scoped, tag = 'scoped memory for tpu_custom_call.1']
    #allocation9 [shape = 'u8[4096]{0}', space=vmem, size = 0x1000, scoped, tag = 'input window, operand 2, single buffered']
    #allocation10 [shape = 'u8[262144]{0}', space=vmem, size = 0x40000, scoped, tag = 'input window, operand 3, single buffered']
    #allocation11 [shape = 's32[1]{0}', space=sflag, size = 0x4, scoped, tag = 'scoped memory for tpu_custom_call.1']
    #allocation12 [shape = 'u8[262144]{0}', space=vmem, size = 0x40000, scoped, tag = 'input window, operand 4, single buffered']
    #allocation13 [shape = 'u8[4096]{0}', space=vmem, size = 0x1000, scoped, tag = 'output window, operand 0, single buffered']
    #allocation14 [shape = 'u8[4096]{0}', space=vmem, size = 0x1000, scoped, tag = 'output window, operand 1, single buffered']
    #allocation15 [shape = 's32[1]{0}', space=sflag, size = 0x4, scoped, tag = 'scoped memory for tpu_custom_call.1']
    %13 = vsyncpa [#allocation5], 0
    %s14 = scalar_lea.sflag [#allocation5], 1
    %15 = vsyncpa %s14, 0
    %16 = vsyncpa [#allocation8], 0
    %17 = vsyncpa [#allocation11], 0
    %18 = vsyncpa [#allocation6], 0
    %19 = vsyncpa [#allocation15], 0
    loop: start=0, step=1, limit=10
    $region2: #{tpu_custom_call.1} parent=1 // loop_pre_header
      _
    $region3: #{tpu_custom_call.1} parent=1 // loop_header
      %s21 = sphi 0, %s25
      %p22 = scmp.ge.s32.totalorder %s21, 10
      %s31 = sphi 0, %s33
      %s34 = sphi 0, %s31
      %s35 = sphi 0, %s34
      %s51 = sphi 0, %s35
      %s55 = sphi 0, %s55
      %s57 = sphi 0, %s55
      %s58 = sphi 0, %s57
      %s72 = sphi 0, %s58
      %s76 = sphi 0, %s76
      %s78 = sphi 0, %s76
      %s79 = sphi 0, %s78
      %s93 = sphi 0, %s79
      %s97 = sphi 0, %s97
      %s99 = sphi 0, %s97
      %s100 = sphi 0, %s99
      %s114 = sphi 0, %s100
      %s118 = sphi 0, %s118
      %s120 = sphi 0, %s118
      %s121 = sphi 0, %s120
      %s135 = sphi 0, %s121
      %s139 = sphi 0, %s139
      %s141 = sphi 0, %s139
      %s142 = sphi 0, %s141
      %s156 = sphi 0, %s142
      %s160 = sphi 0, %s160
      %s162 = sphi 0, %s160
      %s163 = sphi 0, %s162
      %s177 = sphi 0, %s163
      %s181 = sphi 0, %s181
      %s183 = sphi 0, %s181
      %s184 = sphi 0, %s183
      %s198 = sphi 0, %s184
    $region4: #{tpu_custom_call.1} parent=1 // loop_header_branch
      %24 = sbr.rel (%p22) target = $region8
    $region5: #{tpu_custom_call.1} parent=1 // loop_body
      %s26 = ssub.s32 %s21, 1
      %s27 = ssub.s32 %s21, 2
      %s28 = sadd.s32 %s21, 1
      %s29 = ssub.s32 %s21, %s28
      %p30 = scmp.eq.s32.totalorder %s29, 0
      %s32 = sadd.s32 %s31, 1
      %s33 = scalar_select %p30, %s31, %s32
      %p36 = pneg %p30
      %p37 = scmp.eq.s32.totalorder %s21, 7
      %p38 = por %p36, %p37
      %p39 = scmp.ne.s32.totalorder %s31, %s34
      %p40 = scmp.eq.s32.totalorder %s21, 0
      %p41 = por %p39, %p40
      %p42 = scmp.ne.s32.totalorder %s31, %s34
      %p43 = scmp.eq.s32.totalorder %s26, 7
      %p44 = por %p42, %p43
      %p45 = scmp.ne.s32.totalorder %s34, %s35
      %p46 = scmp.eq.s32.totalorder %s26, 0
      %p47 = por %p45, %p46
      %p48 = scmp.ne.s32.totalorder %s34, %s35
      %p49 = scmp.eq.s32.totalorder %s27, 7
      %p50 = por %p48, %p49
      %p52 = scmp.ne.s32.totalorder %s35, %s51
      %p53 = scmp.eq.s32.totalorder %s27, 0
      %p54 = por %p52, %p53
      %s56 = sadd.s32 %s55, 1
      %p59 = scmp.eq.s32.totalorder %s21, 7
      %p60 = scmp.ne.s32.totalorder %s55, %s57
      %p61 = scmp.eq.s32.totalorder %s21, 0
      %p62 = por %p60, %p61
      %p63 = scmp.ne.s32.totalorder %s55, %s57
      %p64 = scmp.eq.s32.totalorder %s26, 7
      %p65 = por %p63, %p64
      %p66 = scmp.ne.s32.totalorder %s57, %s58
      %p67 = scmp.eq.s32.totalorder %s26, 0
      %p68 = por %p66, %p67
      %p69 = scmp.ne.s32.totalorder %s57, %s58
      %p70 = scmp.eq.s32.totalorder %s27, 7
      %p71 = por %p69, %p70
      %p73 = scmp.ne.s32.totalorder %s58, %s72
      %p74 = scmp.eq.s32.totalorder %s27, 0
      %p75 = por %p73, %p74
      %s77 = sadd.s32 %s76, 1
      %p80 = scmp.eq.s32.totalorder %s21, 7
      %p81 = scmp.ne.s32.totalorder %s76, %s78
      %p82 = scmp.eq.s32.totalorder %s21, 0
      %p83 = por %p81, %p82
      %p84 = scmp.ne.s32.totalorder %s76, %s78
      %p85 = scmp.eq.s32.totalorder %s26, 7
      %p86 = por %p84, %p85
      %p87 = scmp.ne.s32.totalorder %s78, %s79
      %p88 = scmp.eq.s32.totalorder %s26, 0
      %p89 = por %p87, %p88
      %p90 = scmp.ne.s32.totalorder %s78, %s79
      %p91 = scmp.eq.s32.totalorder %s27, 7
      %p92 = por %p90, %p91
      %p94 = scmp.ne.s32.totalorder %s79, %s93
      %p95 = scmp.eq.s32.totalorder %s27, 0
      %p96 = por %p94, %p95
      %s98 = sadd.s32 %s97, 1
      %p101 = scmp.eq.s32.totalorder %s21, 7
      %p102 = scmp.ne.s32.totalorder %s97, %s99
      %p103 = scmp.eq.s32.totalorder %s21, 0
      %p104 = por %p102, %p103
      %p105 = scmp.ne.s32.totalorder %s97, %s99
      %p106 = scmp.eq.s32.totalorder %s26, 7
      %p107 = por %p105, %p106
      %p108 = scmp.ne.s32.totalorder %s99, %s100
      %p109 = scmp.eq.s32.totalorder %s26, 0
      %p110 = por %p108, %p109
      %p111 = scmp.ne.s32.totalorder %s99, %s100
      %p112 = scmp.eq.s32.totalorder %s27, 7
      %p113 = por %p111, %p112
      %p115 = scmp.ne.s32.totalorder %s100, %s114
      %p116 = scmp.eq.s32.totalorder %s27, 0
      %p117 = por %p115, %p116
      %s119 = sadd.s32 %s118, 1
      %p122 = scmp.eq.s32.totalorder %s21, 7
      %p123 = scmp.ne.s32.totalorder %s118, %s120
      %p124 = scmp.eq.s32.totalorder %s21, 0
      %p125 = por %p123, %p124
      %p126 = scmp.ne.s32.totalorder %s118, %s120
      %p127 = scmp.eq.s32.totalorder %s26, 7
      %p128 = por %p126, %p127
      %p129 = scmp.ne.s32.totalorder %s120, %s121
      %p130 = scmp.eq.s32.totalorder %s26, 0
      %p131 = por %p129, %p130
      %p132 = scmp.ne.s32.totalorder %s120, %s121
      %p133 = scmp.eq.s32.totalorder %s27, 7
      %p134 = por %p132, %p133
      %p136 = scmp.ne.s32.totalorder %s121, %s135
      %p137 = scmp.eq.s32.totalorder %s27, 0
      %p138 = por %p136, %p137
      %s140 = sadd.s32 %s139, 1
      %p143 = scmp.eq.s32.totalorder %s21, 7
      %p144 = scmp.ne.s32.totalorder %s139, %s141
      %p145 = scmp.eq.s32.totalorder %s21, 0
      %p146 = por %p144, %p145
      %p147 = scmp.ne.s32.totalorder %s139, %s141
      %p148 = scmp.eq.s32.totalorder %s26, 7
      %p149 = por %p147, %p148
      %p150 = scmp.ne.s32.totalorder %s141, %s142
      %p151 = scmp.eq.s32.totalorder %s26, 0
      %p152 = por %p150, %p151
      %p153 = scmp.ne.s32.totalorder %s141, %s142
      %p154 = scmp.eq.s32.totalorder %s27, 7
      %p155 = por %p153, %p154
      %p157 = scmp.ne.s32.totalorder %s142, %s156
      %p158 = scmp.eq.s32.totalorder %s27, 0
      %p159 = por %p157, %p158
      %s161 = sadd.s32 %s160, 1
      %p164 = scmp.eq.s32.totalorder %s21, 7
      %p165 = scmp.ne.s32.totalorder %s160, %s162
      %p166 = scmp.eq.s32.totalorder %s21, 0
      %p167 = por %p165, %p166
      %p168 = scmp.ne.s32.totalorder %s160, %s162
      %p169 = scmp.eq.s32.totalorder %s26, 7
      %p170 = por %p168, %p169
      %p171 = scmp.ne.s32.totalorder %s162, %s163
      %p172 = scmp.eq.s32.totalorder %s26, 0
      %p173 = por %p171, %p172
      %p174 = scmp.ne.s32.totalorder %s162, %s163
      %p175 = scmp.eq.s32.totalorder %s27, 7
      %p176 = por %p174, %p175
      %p178 = scmp.ne.s32.totalorder %s163, %s177
      %p179 = scmp.eq.s32.totalorder %s27, 0
      %p180 = por %p178, %p179
      %s182 = sadd.s32 %s181, 1
      %p185 = scmp.eq.s32.totalorder %s21, 7
      %p186 = scmp.ne.s32.totalorder %s181, %s183
      %p187 = scmp.eq.s32.totalorder %s21, 0
      %p188 = por %p186, %p187
      %p189 = scmp.ne.s32.totalorder %s181, %s183
      %p190 = scmp.eq.s32.totalorder %s26, 7
      %p191 = por %p189, %p190
      %p192 = scmp.ne.s32.totalorder %s183, %s184
      %p193 = scmp.eq.s32.totalorder %s26, 0
      %p194 = por %p192, %p193
      %p195 = scmp.ne.s32.totalorder %s183, %s184
      %p196 = scmp.eq.s32.totalorder %s27, 7
      %p197 = por %p195, %p196
      %p199 = scmp.ne.s32.totalorder %s184, %s198
      %p200 = scmp.eq.s32.totalorder %s27, 0
      %p201 = por %p199, %p200
      %p202 = scmp.le.s32.totalorder 1, %s21
      %p203 = scmp.lt.s32.totalorder %s21, 9
      %p204 = pnand %p202, %p203
      %p205 = pneg %p204
      // Predicated region
      $region9: #{tpu_custom_call.1} parent=5 // pred_check
        _
      $region10: #{tpu_custom_call.1} parent=5 // pred_check_branch
        %207 = sbr.rel (%p204) target = $region12
      $region11: #{tpu_custom_call.1} parent=5 // pred_region
        %s208 = ssub.s32 %s21, 1
        // Predicated region
        $region13: #{tpu_custom_call.1} parent=11 // pred_check
          %p209 = pneg %p68
        $region14: #{tpu_custom_call.1} parent=11 // pred_check_branch
          %211 = sbr.rel (%p209) target = $region16
        $region15: #{tpu_custom_call.1} parent=11 // pred_region
          %s213 = ssub.s32 128, 128
          %214 = vsyncadd [#allocation8], %s213
          %s216 = sshll.u32 [#allocation7], 4
          %s217 = int_to_ptr.vmem [resolvable:$true] %s216
          %219 = dma.hbm_to_vmem [thread:$0]  %s1, 128, %s217, [#allocation8]
        $region16: #{tpu_custom_call.1} parent=11 // pred_fallthru
          _
        // Predicated region
        $region17: #{tpu_custom_call.1} parent=11 // pred_check
          %p220 = pneg %p89
        $region18: #{tpu_custom_call.1} parent=11 // pred_check_branch
          %222 = sbr.rel (%p220) target = $region20
        $region19: #{tpu_custom_call.1} parent=11 // pred_region
          %s224 = ssub.s32 128, 128
          %225 = vsyncadd [#allocation8], %s224
          %s227 = sshll.u32 [#allocation9], 4
          %s228 = int_to_ptr.vmem [resolvable:$true] %s227
          %230 = dma.hbm_to_vmem [thread:$0]  %s2, 128, %s228, [#allocation8]
        $region20: #{tpu_custom_call.1} parent=11 // pred_fallthru
          _
        // Predicated region
        $region21: #{tpu_custom_call.1} parent=11 // pred_check
          %p231 = pneg %p110
        $region22: #{tpu_custom_call.1} parent=11 // pred_check_branch
          %233 = sbr.rel (%p231) target = $region24
        $region23: #{tpu_custom_call.1} parent=11 // pred_region
          %s235 = ssub.s32 8192, 8192
          %236 = vsyncadd [#allocation11], %s235
          %s237 = sshll.u32 [#allocation10], 4
          %s238 = int_to_ptr.vmem [resolvable:$true] %s237
          %243 = dma.hbm_to_vmem [thread:$0]  %s3, 8192, %s238, [#allocation11], 512, 512, 32
        $region24: #{tpu_custom_call.1} parent=11 // pred_fallthru
          _
        // Predicated region
        $region25: #{tpu_custom_call.1} parent=11 // pred_check
          %p244 = pneg %p131
        $region26: #{tpu_custom_call.1} parent=11 // pred_check_branch
          %246 = sbr.rel (%p244) target = $region28
        $region27: #{tpu_custom_call.1} parent=11 // pred_region
          %s248 = ssub.s32 8192, 8192
          %249 = vsyncadd [#allocation11], %s248
          %s250 = sshll.u32 [#allocation12], 4
          %s251 = int_to_ptr.vmem [resolvable:$true] %s250
          %256 = dma.hbm_to_vmem [thread:$0]  %s4, 8192, %s251, [#allocation11], 512, 512, 32
        $region28: #{tpu_custom_call.1} parent=11 // pred_fallthru
          _
        // Predicated region
        $region29: #{tpu_custom_call.1} parent=11 // pred_check
          %p257 = pneg %p152
        $region30: #{tpu_custom_call.1} parent=11 // pred_check_branch
          %259 = sbr.rel (%p257) target = $region32
        $region31: #{tpu_custom_call.1} parent=11 // pred_region
          _
        $region32: #{tpu_custom_call.1} parent=11 // pred_fallthru
          _
      $region12: #{tpu_custom_call.1} parent=5 // pred_fallthru
        _
      %p260 = scmp.lt.s32.totalorder %s21, 8
      // Predicated region
      $region33: #{tpu_custom_call.1} parent=5 // pred_check
        %p261 = pneg %p260
      $region34: #{tpu_custom_call.1} parent=5 // pred_check_branch
        %263 = sbr.rel (%p261) target = $region36
      $region35: #{tpu_custom_call.1} parent=5 // pred_region
        // Predicated region
        $region37: #{tpu_custom_call.1} parent=35 // pred_check
          %p264 = pneg %p41
        $region38: #{tpu_custom_call.1} parent=35 // pred_check_branch
          %266 = sbr.rel (%p264) target = $region40
        $region39: #{tpu_custom_call.1} parent=35 // pred_region
          %s267 = sand.u32 %s31, 1
          %s268 = scalar_lea.sflag [#allocation5], %s267
          %s269 = sand.u32 %s31, 1
          %s270 = smul.addr %s269, 8
          %s271 = scalar_lea.vmem [#allocation4], %s270
          %s273 = ssub.s32 128, 128
          %274 = vsyncadd %s268, %s273
          %s275 = smul.addr %s21, 128
          %s276 = scalar_lea.hbm %s0, %s275
          %s278 = sshll.u32 %s271, 4
          %s279 = int_to_ptr.vmem [resolvable:$true] %s278
          %281 = dma.hbm_to_vmem [thread:$0]  %s276, 128, %s279, %s268
        $region40: #{tpu_custom_call.1} parent=35 // pred_fallthru
          _
      $region36: #{tpu_custom_call.1} parent=5 // pred_fallthru
        _
      %p282 = scmp.le.s32.totalorder 1, %s21
      %p283 = scmp.lt.s32.totalorder %s21, 9
      %p284 = pnand %p282, %p283
      %p285 = pneg %p284
      // Predicated region
      $region41: #{tpu_custom_call.1} parent=5 // pred_check
        _
      $region42: #{tpu_custom_call.1} parent=5 // pred_check_branch
        %287 = sbr.rel (%p284) target = $region44
      $region43: #{tpu_custom_call.1} parent=5 // pred_region
        %s288 = ssub.s32 %s21, 1
        %s289 = sand.u32 %s34, 1
        %s290 = scalar_lea.sflag [#allocation5], %s289
        %s291 = sand.u32 %s34, 1
        %s292 = smul.addr %s291, 8
        %s293 = scalar_lea.vmem [#allocation4], %s292
        // Predicated region
        $region45: #{tpu_custom_call.1} parent=43 // pred_check
          %p294 = pneg %p47
        $region46: #{tpu_custom_call.1} parent=43 // pred_check_branch
          %296 = sbr.rel (%p294) target = $region48
        $region47: #{tpu_custom_call.1} parent=43 // pred_region
          %297 = dma.done %s290, 128
        $region48: #{tpu_custom_call.1} parent=43 // pred_fallthru
          _
        // Predicated region
        $region49: #{tpu_custom_call.1} parent=43 // pred_check
          %p298 = pneg %p68
        $region50: #{tpu_custom_call.1} parent=43 // pred_check_branch
          %300 = sbr.rel (%p298) target = $region52
        $region51: #{tpu_custom_call.1} parent=43 // pred_region
          %301 = dma.done [#allocation8], 128
        $region52: #{tpu_custom_call.1} parent=43 // pred_fallthru
          _
        // Predicated region
        $region53: #{tpu_custom_call.1} parent=43 // pred_check
          %p302 = pneg %p89
        $region54: #{tpu_custom_call.1} parent=43 // pred_check_branch
          %304 = sbr.rel (%p302) target = $region56
        $region55: #{tpu_custom_call.1} parent=43 // pred_region
          %305 = dma.done [#allocation8], 128
        $region56: #{tpu_custom_call.1} parent=43 // pred_fallthru
          _
        // Predicated region
        $region57: #{tpu_custom_call.1} parent=43 // pred_check
          %p306 = pneg %p110
        $region58: #{tpu_custom_call.1} parent=43 // pred_check_branch
          %308 = sbr.rel (%p306) target = $region60
        $region59: #{tpu_custom_call.1} parent=43 // pred_region
          %309 = dma.done [#allocation11], 8192
        $region60: #{tpu_custom_call.1} parent=43 // pred_fallthru
          _
        // Predicated region
        $region61: #{tpu_custom_call.1} parent=43 // pred_check
          %p310 = pneg %p131
        $region62: #{tpu_custom_call.1} parent=43 // pred_check_branch
          %312 = sbr.rel (%p310) target = $region64
        $region63: #{tpu_custom_call.1} parent=43 // pred_region
          %313 = dma.done [#allocation11], 8192
        $region64: #{tpu_custom_call.1} parent=43 // pred_fallthru
          _
        %s314 = sand.u32 %s34, 1
        %s315 = scalar_lea.sflag [#allocation5], %s314
        %s316 = sand.u32 %s34, 1
        %s317 = smul.addr %s316, 8
        %s318 = scalar_lea.vmem [#allocation4], %s317
        %p319 = pneg %p47
        %p320 = pneg %p44
        %p321 = pneg %p68
        %p322 = pneg %p65
        %p323 = pneg %p89
        %p324 = pneg %p86
        %p325 = pneg %p110
        %p326 = pneg %p107
        %p327 = pneg %p131
        %p328 = pneg %p128
        %p329 = pneg %p152
        %p330 = pneg %p149
        %p331 = pneg %p173
        %p332 = pneg %p170
        %p333 = pneg %p194
        %p334 = pneg %p191
        %p335 = scmp.eq.s32.totalorder %s26, 0
        // Predicated region
        $region65: #{tpu_custom_call.1} parent=43 // pred_check
          %p336 = pneg %p335
        $region66: #{tpu_custom_call.1} parent=43 // pred_check_branch
          %338 = sbr.rel (%p336) target = $region68
        $region67: #{tpu_custom_call.1} parent=43 // pred_region
          %v339 = vld [vmem:[#allocation7] sm:$0xff]
          %340 = vst [vmem:[#allocation2] sm:$0xff] %v339
          %v341 = vld [vmem:[#allocation9] sm:$0xff]
          %342 = vst [vmem:[#allocation3] sm:$0xff] %v341
        $region68: #{tpu_custom_call.1} parent=43 // pred_fallthru
          _
        %v343 = vld [vmem:[%s293] sm:$0xff]
        %v344 = vld [vmem:[#allocation3] sm:$0xff]
        %v345 = vld [vmem:[#allocation2] sm:$0xff]
        %v346 = vld [vmem:[#allocation10] sm:$0xff]
        %v347 = vld [vmem:[#allocation10 + $0x8] sm:$0xff]
        %v348 = vld [vmem:[#allocation10 + $0x10] sm:$0xff]
        %v349 = vld [vmem:[#allocation10 + $0x18] sm:$0xff]
        %v350 = vld [vmem:[#allocation10 + $0x20] sm:$0xff]
        %v351 = vld [vmem:[#allocation10 + $0x28] sm:$0xff]
        %v352 = vld [vmem:[#allocation10 + $0x30] sm:$0xff]
        %v353 = vld [vmem:[#allocation10 + $0x38] sm:$0xff]
        %v354 = vld [vmem:[#allocation10 + $0x40] sm:$0xff]
        %v355 = vld [vmem:[#allocation10 + $0x48] sm:$0xff]
        %v356 = vld [vmem:[#allocation10 + $0x50] sm:$0xff]
        %v357 = vld [vmem:[#allocation10 + $0x58] sm:$0xff]
        %v358 = vld [vmem:[#allocation10 + $0x60] sm:$0xff]
        %v359 = vld [vmem:[#allocation10 + $0x68] sm:$0xff]
        %v360 = vld [vmem:[#allocation10 + $0x70] sm:$0xff]
        %v361 = vld [vmem:[#allocation10 + $0x78] sm:$0xff]
        %v362 = vld [vmem:[#allocation10 + $0x80] sm:$0xff]
        %v363 = vld [vmem:[#allocation10 + $0x88] sm:$0xff]
        %v364 = vld [vmem:[#allocation10 + $0x90] sm:$0xff]
        %v365 = vld [vmem:[#allocation10 + $0x98] sm:$0xff]
        %v366 = vld [vmem:[#allocation10 + $0xa0] sm:$0xff]
        %v367 = vld [vmem:[#allocation10 + $0xa8] sm:$0xff]
        %v368 = vld [vmem:[#allocation10 + $0xb0] sm:$0xff]
        %v369 = vld [vmem:[#allocation10 + $0xb8] sm:$0xff]
        %v370 = vld [vmem:[#allocation10 + $0xc0] sm:$0xff]
        %v371 = vld [vmem:[#allocation10 + $0xc8] sm:$0xff]
        %v372 = vld [vmem:[#allocation10 + $0xd0] sm:$0xff]
        %v373 = vld [vmem:[#allocation10 + $0xd8] sm:$0xff]
        %v374 = vld [vmem:[#allocation10 + $0xe0] sm:$0xff]
        %v375 = vld [vmem:[#allocation10 + $0xe8] sm:$0xff]
        %v376 = vld [vmem:[#allocation10 + $0xf0] sm:$0xff]
        %v377 = vld [vmem:[#allocation10 + $0xf8] sm:$0xff]
        %v378 = vld [vmem:[#allocation10 + $0x100] sm:$0xff]
        %v379 = vld [vmem:[#allocation10 + $0x108] sm:$0xff]
        %v380 = vld [vmem:[#allocation10 + $0x110] sm:$0xff]
        %v381 = vld [vmem:[#allocation10 + $0x118] sm:$0xff]
        %v382 = vld [vmem:[#allocation10 + $0x120] sm:$0xff]
        %v383 = vld [vmem:[#allocation10 + $0x128] sm:$0xff]
        %v384 = vld [vmem:[#allocation10 + $0x130] sm:$0xff]
        %v385 = vld [vmem:[#allocation10 + $0x138] sm:$0xff]
        %v386 = vld [vmem:[#allocation10 + $0x140] sm:$0xff]
        %v387 = vld [vmem:[#allocation10 + $0x148] sm:$0xff]
        %v388 = vld [vmem:[#allocation10 + $0x150] sm:$0xff]
        %v389 = vld [vmem:[#allocation10 + $0x158] sm:$0xff]
        %v390 = vld [vmem:[#allocation10 + $0x160] sm:$0xff]
        %v391 = vld [vmem:[#allocation10 + $0x168] sm:$0xff]
        %v392 = vld [vmem:[#allocation10 + $0x170] sm:$0xff]
        %v393 = vld [vmem:[#allocation10 + $0x178] sm:$0xff]
        %v394 = vld [vmem:[#allocation10 + $0x180] sm:$0xff]
        %v395 = vld [vmem:[#allocation10 + $0x188] sm:$0xff]
        %v396 = vld [vmem:[#allocation10 + $0x190] sm:$0xff]
        %v397 = vld [vmem:[#allocation10 + $0x198] sm:$0xff]
        %v398 = vld [vmem:[#allocation10 + $0x1a0] sm:$0xff]
        %v399 = vld [vmem:[#allocation10 + $0x1a8] sm:$0xff]
        %v400 = vld [vmem:[#allocation10 + $0x1b0] sm:$0xff]
        %v401 = vld [vmem:[#allocation10 + $0x1b8] sm:$0xff]
        %v402 = vld [vmem:[#allocation10 + $0x1c0] sm:$0xff]
        %v403 = vld [vmem:[#allocation10 + $0x1c8] sm:$0xff]
        %v404 = vld [vmem:[#allocation10 + $0x1d0] sm:$0xff]
        %v405 = vld [vmem:[#allocation10 + $0x1d8] sm:$0xff]
        %v406 = vld [vmem:[#allocation10 + $0x1e0] sm:$0xff]
        %v407 = vld [vmem:[#allocation10 + $0x1e8] sm:$0xff]
        %v408 = vld [vmem:[#allocation10 + $0x1f0] sm:$0xff]
        %v409 = vld [vmem:[#allocation10 + $0x1f8] sm:$0xff]
        %v410 = vld [vmem:[#allocation12] sm:$0xff]
        %v411 = vld [vmem:[#allocation12 + $0x8] sm:$0xff]
        %v412 = vld [vmem:[#allocation12 + $0x10] sm:$0xff]
        %v413 = vld [vmem:[#allocation12 + $0x18] sm:$0xff]
        %v414 = vld [vmem:[#allocation12 + $0x20] sm:$0xff]
        %v415 = vld [vmem:[#allocation12 + $0x28] sm:$0xff]
        %v416 = vld [vmem:[#allocation12 + $0x30] sm:$0xff]
        %v417 = vld [vmem:[#allocation12 + $0x38] sm:$0xff]
        %v418 = vld [vmem:[#allocation12 + $0x40] sm:$0xff]
        %v419 = vld [vmem:[#allocation12 + $0x48] sm:$0xff]
        %v420 = vld [vmem:[#allocation12 + $0x50] sm:$0xff]
        %v421 = vld [vmem:[#allocation12 + $0x58] sm:$0xff]
        %v422 = vld [vmem:[#allocation12 + $0x60] sm:$0xff]
        %v423 = vld [vmem:[#allocation12 + $0x68] sm:$0xff]
        %v424 = vld [vmem:[#allocation12 + $0x70] sm:$0xff]
        %v425 = vld [vmem:[#allocation12 + $0x78] sm:$0xff]
        %v426 = vld [vmem:[#allocation12 + $0x80] sm:$0xff]
        %v427 = vld [vmem:[#allocation12 + $0x88] sm:$0xff]
        %v428 = vld [vmem:[#allocation12 + $0x90] sm:$0xff]
        %v429 = vld [vmem:[#allocation12 + $0x98] sm:$0xff]
        %v430 = vld [vmem:[#allocation12 + $0xa0] sm:$0xff]
        %v431 = vld [vmem:[#allocation12 + $0xa8] sm:$0xff]
        %v432 = vld [vmem:[#allocation12 + $0xb0] sm:$0xff]
        %v433 = vld [vmem:[#allocation12 + $0xb8] sm:$0xff]
        %v434 = vld [vmem:[#allocation12 + $0xc0] sm:$0xff]
        %v435 = vld [vmem:[#allocation12 + $0xc8] sm:$0xff]
        %v436 = vld [vmem:[#allocation12 + $0xd0] sm:$0xff]
        %v437 = vld [vmem:[#allocation12 + $0xd8] sm:$0xff]
        %v438 = vld [vmem:[#allocation12 + $0xe0] sm:$0xff]
        %v439 = vld [vmem:[#allocation12 + $0xe8] sm:$0xff]
        %v440 = vld [vmem:[#allocation12 + $0xf0] sm:$0xff]
        %v441 = vld [vmem:[#allocation12 + $0xf8] sm:$0xff]
        %v442 = vld [vmem:[#allocation12 + $0x100] sm:$0xff]
        %v443 = vld [vmem:[#allocation12 + $0x108] sm:$0xff]
        %v444 = vld [vmem:[#allocation12 + $0x110] sm:$0xff]
        %v445 = vld [vmem:[#allocation12 + $0x118] sm:$0xff]
        %v446 = vld [vmem:[#allocation12 + $0x120] sm:$0xff]
        %v447 = vld [vmem:[#allocation12 + $0x128] sm:$0xff]
        %v448 = vld [vmem:[#allocation12 + $0x130] sm:$0xff]
        %v449 = vld [vmem:[#allocation12 + $0x138] sm:$0xff]
        %v450 = vld [vmem:[#allocation12 + $0x140] sm:$0xff]
        %v451 = vld [vmem:[#allocation12 + $0x148] sm:$0xff]
        %v452 = vld [vmem:[#allocation12 + $0x150] sm:$0xff]
        %v453 = vld [vmem:[#allocation12 + $0x158] sm:$0xff]
        %v454 = vld [vmem:[#allocation12 + $0x160] sm:$0xff]
        %v455 = vld [vmem:[#allocation12 + $0x168] sm:$0xff]
        %v456 = vld [vmem:[#allocation12 + $0x170] sm:$0xff]
        %v457 = vld [vmem:[#allocation12 + $0x178] sm:$0xff]
        %v458 = vld [vmem:[#allocation12 + $0x180] sm:$0xff]
        %v459 = vld [vmem:[#allocation12 + $0x188] sm:$0xff]
        %v460 = vld [vmem:[#allocation12 + $0x190] sm:$0xff]
        %v461 = vld [vmem:[#allocation12 + $0x198] sm:$0xff]
        %v462 = vld [vmem:[#allocation12 + $0x1a0] sm:$0xff]
        %v463 = vld [vmem:[#allocation12 + $0x1a8] sm:$0xff]
        %v464 = vld [vmem:[#allocation12 + $0x1b0] sm:$0xff]
        %v465 = vld [vmem:[#allocation12 + $0x1b8] sm:$0xff]
        %v466 = vld [vmem:[#allocation12 + $0x1c0] sm:$0xff]
        %v467 = vld [vmem:[#allocation12 + $0x1c8] sm:$0xff]
        %v468 = vld [vmem:[#allocation12 + $0x1d0] sm:$0xff]
        %v469 = vld [vmem:[#allocation12 + $0x1d8] sm:$0xff]
        %v470 = vld [vmem:[#allocation12 + $0x1e0] sm:$0xff]
        %v471 = vld [vmem:[#allocation12 + $0x1e8] sm:$0xff]
        %v472 = vld [vmem:[#allocation12 + $0x1f0] sm:$0xff]
        %v473 = vld [vmem:[#allocation12 + $0x1f8] sm:$0xff]
        %474 = vmatprep.subr.mxu0 %v471
        %475 = vmatpush1.msra.mxu0 %v470
        %476 = vmatprep.subr.mxu0 %v467
        %477 = vmatpush1.msra.mxu0 %v466
        %478 = vmatprep.subr.mxu0 %v463
        %479 = vmatpush1.msra.mxu0 %v462
        %480 = vmatprep.subr.mxu0 %v459
        %481 = vmatpush1.msra.mxu0 %v458
        %482 = vmatprep.subr.mxu0 %v455
        %483 = vmatpush1.msra.mxu0 %v454
        %484 = vmatprep.subr.mxu0 %v451
        %485 = vmatpush1.msra.mxu0 %v450
        %486 = vmatprep.subr.mxu0 %v447
        %487 = vmatpush1.msra.mxu0 %v446
        %488 = vmatprep.subr.mxu0 %v443
        %489 = vmatpush1.msra.mxu0 %v442
        %490 = vmatprep.subr.mxu0 %v439
        %491 = vmatpush1.msra.mxu0 %v438
        %492 = vmatprep.subr.mxu0 %v435
        %493 = vmatpush1.msra.mxu0 %v434
        %494 = vmatprep.subr.mxu0 %v431
        %495 = vmatpush1.msra.mxu0 %v430
        %496 = vmatprep.subr.mxu0 %v427
        %497 = vmatpush1.msra.mxu0 %v426
        %498 = vmatprep.subr.mxu0 %v423
        %499 = vmatpush1.msra.mxu0 %v422
        %500 = vmatprep.subr.mxu0 %v419
        %501 = vmatpush1.msra.mxu0 %v418
        %502 = vmatprep.subr.mxu0 %v415
        %503 = vmatpush1.msra.mxu0 %v414
        %504 = vmatprep.subr.mxu0 %v411
        %505 = vmatpush1.msra.mxu0 %v410
        %506 = vmatprep.subr.mxu0 0.0
        %507 = vmatpush2.msra.mxu0 0.0
        %508 = vmatprep.subr.mxu0 0.0
        %509 = vmatpush2.msra.mxu0 0.0
        %510 = vmatprep.subr.mxu0 0.0
        %511 = vmatpush2.msra.mxu0 0.0
        %512 = vmatprep.subr.mxu0 0.0
        %513 = vmatpush2.msra.mxu0 0.0
        %514 = vmatprep.subr.mxu0 0.0
        %515 = vmatpush2.msra.mxu0 0.0
        %516 = vmatprep.subr.mxu0 0.0
        %517 = vmatpush2.msra.mxu0 0.0
        %518 = vmatprep.subr.mxu0 0.0
        %519 = vmatpush2.msra.mxu0 0.0
        %520 = vmatprep.subr.mxu0 0.0
        %521 = vmatpush2.msra.mxu0 0.0
        %522 = vmatprep.subr.mxu0 0.0
        %523 = vmatpush2.msra.mxu0 0.0
        %524 = vmatprep.subr.mxu0 0.0
        %525 = vmatpush2.msra.mxu0 0.0
        %526 = vmatprep.subr.mxu0 0.0
        %527 = vmatpush2.msra.mxu0 0.0
        %528 = vmatprep.subr.mxu0 0.0
        %529 = vmatpush2.msra.mxu0 0.0
        %530 = vmatprep.subr.mxu0 0.0
        %531 = vmatpush2.msra.mxu0 0.0
        %532 = vmatprep.subr.mxu0 0.0
        %533 = vmatpush2.msra.mxu0 0.0
        %534 = vmatprep.subr.mxu0 0.0
        %535 = vmatpush2.msra.mxu0 0.0
        %536 = vmatprep.subr.mxu0 0.0
        %537 = vmatpush2.msra.mxu0 0.0
        %538 = vmatprep.mubr.f32.mxu0 0.0
        %539 = vmatmul.mubr.f32.gmra.mxu0 %v344
        %v540 = vpop.f32.mrf.mxu0
        %v541 = vadd.f32 0.0, %v540
        %v542 = vpop.f32.mrf.mxu0
        %v543 = vadd.f32 0.0, %v542
        %544 = vdwg.mxu0
        %545 = vmatprep.subr.mxu0 %v473
        %546 = vmatpush1.msra.mxu0 %v472
        %547 = vmatprep.subr.mxu0 %v469
        %548 = vmatpush1.msra.mxu0 %v468
        %549 = vmatprep.subr.mxu0 %v465
        %550 = vmatpush1.msra.mxu0 %v464
        %551 = vmatprep.subr.mxu0 %v461
        %552 = vmatpush1.msra.mxu0 %v460
        %553 = vmatprep.subr.mxu0 %v457
        %554 = vmatpush1.msra.mxu0 %v456
        %555 = vmatprep.subr.mxu0 %v453
        %556 = vmatpush1.msra.mxu0 %v452
        %557 = vmatprep.subr.mxu0 %v449
        %558 = vmatpush1.msra.mxu0 %v448
        %559 = vmatprep.subr.mxu0 %v445
        %560 = vmatpush1.msra.mxu0 %v444
        %561 = vmatprep.subr.mxu0 %v441
        %562 = vmatpush1.msra.mxu0 %v440
        %563 = vmatprep.subr.mxu0 %v437
        %564 = vmatpush1.msra.mxu0 %v436
        %565 = vmatprep.subr.mxu0 %v433
        %566 = vmatpush1.msra.mxu0 %v432
        %567 = vmatprep.subr.mxu0 %v429
        %568 = vmatpush1.msra.mxu0 %v428
        %569 = vmatprep.subr.mxu0 %v425
        %570 = vmatpush1.msra.mxu0 %v424
        %571 = vmatprep.subr.mxu0 %v421
        %572 = vmatpush1.msra.mxu0 %v420
        %573 = vmatprep.subr.mxu0 %v417
        %574 = vmatpush1.msra.mxu0 %v416
        %575 = vmatprep.subr.mxu0 %v413
        %576 = vmatpush1.msra.mxu0 %v412
        %577 = vmatprep.subr.mxu0 0.0
        %578 = vmatpush2.msra.mxu0 0.0
        %579 = vmatprep.subr.mxu0 0.0
        %580 = vmatpush2.msra.mxu0 0.0
        %581 = vmatprep.subr.mxu0 0.0
        %582 = vmatpush2.msra.mxu0 0.0
        %583 = vmatprep.subr.mxu0 0.0
        %584 = vmatpush2.msra.mxu0 0.0
        %585 = vmatprep.subr.mxu0 0.0
        %586 = vmatpush2.msra.mxu0 0.0
        %587 = vmatprep.subr.mxu0 0.0
        %588 = vmatpush2.msra.mxu0 0.0
        %589 = vmatprep.subr.mxu0 0.0
        %590 = vmatpush2.msra.mxu0 0.0
        %591 = vmatprep.subr.mxu0 0.0
        %592 = vmatpush2.msra.mxu0 0.0
        %593 = vmatprep.subr.mxu0 0.0
        %594 = vmatpush2.msra.mxu0 0.0
        %595 = vmatprep.subr.mxu0 0.0
        %596 = vmatpush2.msra.mxu0 0.0
        %597 = vmatprep.subr.mxu0 0.0
        %598 = vmatpush2.msra.mxu0 0.0
        %599 = vmatprep.subr.mxu0 0.0
        %600 = vmatpush2.msra.mxu0 0.0
        %601 = vmatprep.subr.mxu0 0.0
        %602 = vmatpush2.msra.mxu0 0.0
        %603 = vmatprep.subr.mxu0 0.0
        %604 = vmatpush2.msra.mxu0 0.0
        %605 = vmatprep.subr.mxu0 0.0
        %606 = vmatpush2.msra.mxu0 0.0
        %607 = vmatprep.subr.mxu0 0.0
        %608 = vmatpush2.msra.mxu0 0.0
        %609 = vmatprep.mubr.f32.mxu0 0.0
        %610 = vmatmul.mubr.f32.gmra.mxu0 %v344
        %v611 = vpop.f32.mrf.mxu0
        %v612 = vadd.f32 0.0, %v611
        %v613 = vpop.f32.mrf.mxu0
        %v614 = vadd.f32 0.0, %v613
        %615 = vdwg.mxu0
        %616 = vmatprep.subr.mxu0 %v407
        %617 = vmatpush1.msra.mxu0 %v406
        %618 = vmatprep.subr.mxu0 %v403
        %619 = vmatpush1.msra.mxu0 %v402
        %620 = vmatprep.subr.mxu0 %v399
        %621 = vmatpush1.msra.mxu0 %v398
        %622 = vmatprep.subr.mxu0 %v395
        %623 = vmatpush1.msra.mxu0 %v394
        %624 = vmatprep.subr.mxu0 %v391
        %625 = vmatpush1.msra.mxu0 %v390
        %626 = vmatprep.subr.mxu0 %v387
        %627 = vmatpush1.msra.mxu0 %v386
        %628 = vmatprep.subr.mxu0 %v383
        %629 = vmatpush1.msra.mxu0 %v382
        %630 = vmatprep.subr.mxu0 %v379
        %631 = vmatpush1.msra.mxu0 %v378
        %632 = vmatprep.subr.mxu0 %v375
        %633 = vmatpush1.msra.mxu0 %v374
        %634 = vmatprep.subr.mxu0 %v371
        %635 = vmatpush1.msra.mxu0 %v370
        %636 = vmatprep.subr.mxu0 %v367
        %637 = vmatpush1.msra.mxu0 %v366
        %638 = vmatprep.subr.mxu0 %v363
        %639 = vmatpush1.msra.mxu0 %v362
        %640 = vmatprep.subr.mxu0 %v359
        %641 = vmatpush1.msra.mxu0 %v358
        %642 = vmatprep.subr.mxu0 %v355
        %643 = vmatpush1.msra.mxu0 %v354
        %644 = vmatprep.subr.mxu0 %v351
        %645 = vmatpush1.msra.mxu0 %v350
        %646 = vmatprep.subr.mxu0 %v347
        %647 = vmatpush1.msra.mxu0 %v346
        %648 = vmatprep.subr.mxu0 0.0
        %649 = vmatpush2.msra.mxu0 0.0
        %650 = vmatprep.subr.mxu0 0.0
        %651 = vmatpush2.msra.mxu0 0.0
        %652 = vmatprep.subr.mxu0 0.0
        %653 = vmatpush2.msra.mxu0 0.0
        %654 = vmatprep.subr.mxu0 0.0
        %655 = vmatpush2.msra.mxu0 0.0
        %656 = vmatprep.subr.mxu0 0.0
        %657 = vmatpush2.msra.mxu0 0.0
        %658 = vmatprep.subr.mxu0 0.0
        %659 = vmatpush2.msra.mxu0 0.0
        %660 = vmatprep.subr.mxu0 0.0
        %661 = vmatpush2.msra.mxu0 0.0
        %662 = vmatprep.subr.mxu0 0.0
        %663 = vmatpush2.msra.mxu0 0.0
        %664 = vmatprep.subr.mxu0 0.0
        %665 = vmatpush2.msra.mxu0 0.0
        %666 = vmatprep.subr.mxu0 0.0
        %667 = vmatpush2.msra.mxu0 0.0
        %668 = vmatprep.subr.mxu0 0.0
        %669 = vmatpush2.msra.mxu0 0.0
        %670 = vmatprep.subr.mxu0 0.0
        %671 = vmatpush2.msra.mxu0 0.0
        %672 = vmatprep.subr.mxu0 0.0
        %673 = vmatpush2.msra.mxu0 0.0
        %674 = vmatprep.subr.mxu0 0.0
        %675 = vmatpush2.msra.mxu0 0.0
        %676 = vmatprep.subr.mxu0 0.0
        %677 = vmatpush2.msra.mxu0 0.0
        %678 = vmatprep.subr.mxu0 0.0
        %679 = vmatpush2.msra.mxu0 0.0
        %680 = vmatprep.mubr.f32.mxu0 0.0
        %681 = vmatmul.mubr.f32.gmra.mxu0 %v343
        %v682 = vpop.f32.mrf.mxu0
        %v683 = vadd.f32 %v541, %v682
        %v684 = vpop.f32.mrf.mxu0
        %v685 = vadd.f32 %v543, %v684
        %686 = vdwg.mxu0
        %687 = vmatprep.subr.mxu0 %v409
        %688 = vmatpush1.msra.mxu0 %v408
        %689 = vmatprep.subr.mxu0 %v405
        %690 = vmatpush1.msra.mxu0 %v404
        %691 = vmatprep.subr.mxu0 %v401
        %692 = vmatpush1.msra.mxu0 %v400
        %693 = vmatprep.subr.mxu0 %v397
        %694 = vmatpush1.msra.mxu0 %v396
        %695 = vmatprep.subr.mxu0 %v393
        %696 = vmatpush1.msra.mxu0 %v392
        %697 = vmatprep.subr.mxu0 %v389
        %698 = vmatpush1.msra.mxu0 %v388
        %699 = vmatprep.subr.mxu0 %v385
        %700 = vmatpush1.msra.mxu0 %v384
        %701 = vmatprep.subr.mxu0 %v381
        %702 = vmatpush1.msra.mxu0 %v380
        %703 = vmatprep.subr.mxu0 %v377
        %704 = vmatpush1.msra.mxu0 %v376
        %705 = vmatprep.subr.mxu0 %v373
        %706 = vmatpush1.msra.mxu0 %v372
        %707 = vmatprep.subr.mxu0 %v369
        %708 = vmatpush1.msra.mxu0 %v368
        %709 = vmatprep.subr.mxu0 %v365
        %710 = vmatpush1.msra.mxu0 %v364
        %711 = vmatprep.subr.mxu0 %v361
        %712 = vmatpush1.msra.mxu0 %v360
        %713 = vmatprep.subr.mxu0 %v357
        %714 = vmatpush1.msra.mxu0 %v356
        %715 = vmatprep.subr.mxu0 %v353
        %716 = vmatpush1.msra.mxu0 %v352
        %717 = vmatprep.subr.mxu0 %v349
        %718 = vmatpush1.msra.mxu0 %v348
        %719 = vmatprep.subr.mxu0 0.0
        %720 = vmatpush2.msra.mxu0 0.0
        %721 = vmatprep.subr.mxu0 0.0
        %722 = vmatpush2.msra.mxu0 0.0
        %723 = vmatprep.subr.mxu0 0.0
        %724 = vmatpush2.msra.mxu0 0.0
        %725 = vmatprep.subr.mxu0 0.0
        %726 = vmatpush2.msra.mxu0 0.0
        %727 = vmatprep.subr.mxu0 0.0
        %728 = vmatpush2.msra.mxu0 0.0
        %729 = vmatprep.subr.mxu0 0.0
        %730 = vmatpush2.msra.mxu0 0.0
        %731 = vmatprep.subr.mxu0 0.0
        %732 = vmatpush2.msra.mxu0 0.0
        %733 = vmatprep.subr.mxu0 0.0
        %734 = vmatpush2.msra.mxu0 0.0
        %735 = vmatprep.subr.mxu0 0.0
        %736 = vmatpush2.msra.mxu0 0.0
        %737 = vmatprep.subr.mxu0 0.0
        %738 = vmatpush2.msra.mxu0 0.0
        %739 = vmatprep.subr.mxu0 0.0
        %740 = vmatpush2.msra.mxu0 0.0
        %741 = vmatprep.subr.mxu0 0.0
        %742 = vmatpush2.msra.mxu0 0.0
        %743 = vmatprep.subr.mxu0 0.0
        %744 = vmatpush2.msra.mxu0 0.0
        %745 = vmatprep.subr.mxu0 0.0
        %746 = vmatpush2.msra.mxu0 0.0
        %747 = vmatprep.subr.mxu0 0.0
        %748 = vmatpush2.msra.mxu0 0.0
        %749 = vmatprep.subr.mxu0 0.0
        %750 = vmatpush2.msra.mxu0 0.0
        %751 = vmatprep.mubr.f32.mxu0 0.0
        %752 = vmatmul.mubr.f32.gmra.mxu0 %v343
        %v753 = vpop.f32.mrf.mxu0
        %v754 = vadd.f32 %v612, %v753
        %v755 = vpop.f32.mrf.mxu0
        %v756 = vadd.f32 %v614, %v755
        %757 = vdwg.mxu0
        %v758 = vld [vmem:[%s5] sm:$0xf]
        %v760 = vlaneseq
        %v761 = vshrl.u32 %v760, 7
        %v762 = vsub.s32 0, %v761
        %v763 = vrot.slane %v758, %v762
        %v764 = vlaneseq
        %v765 = vshrl.u32 %v764, 7
        %v766 = vsub.s32 1, %v765
        %v767 = vrot.slane %v758, %v766
        %v768 = vlaneseq
        %v769 = vshrl.u32 %v768, 7
        %v770 = vsub.s32 2, %v769
        %v771 = vrot.slane %v758, %v770
        %v772 = vlaneseq
        %v773 = vshrl.u32 %v772, 7
        %v774 = vsub.s32 3, %v773
        %v775 = vrot.slane %v758, %v774
        %v780 = vadd.f32 %v683, %v763
        %v781 = vadd.f32 %v685, %v767
        %v782 = vadd.f32 %v754, %v771
        %v783 = vadd.f32 %v756, %v775
        %v784 = vxor.u32 %v780, 2147483648
        %v785 = vmul.f32 %v784, 1.442695
        %v786 = vpow.pop %v785
        %v787 = vadd.f32 %v786, 1.0
        %v788 = vrcp.pop %v787
        %v789 = vmul.f32 1.0, %v788
        %v790 = vxor.u32 %v781, 2147483648
        %v791 = vmul.f32 %v790, 1.442695
        %v792 = vpow.pop %v791
        %v793 = vadd.f32 %v792, 1.0
        %v794 = vrcp.pop %v793
        %v795 = vmul.f32 1.0, %v794
        %v796 = vxor.u32 %v782, 2147483648
        %v797 = vmul.f32 %v796, 1.442695
        %v798 = vpow.pop %v797
        %v799 = vadd.f32 %v798, 1.0
        %v800 = vrcp.pop %v799
        %v801 = vmul.f32 1.0, %v800
        %v802 = vtanh.pop %v783
        %v803 = vmul.f32 %v789, %v345
        %v804 = vmul.f32 %v795, %v802
        %v805 = vadd.f32 %v803, %v804
        %v806 = vtanh.pop %v805
        %v807 = vmul.f32 %v801, %v806
        %808 = vst [vmem:[#allocation2] sm:$0xff] %v805
        %809 = vst [vmem:[#allocation3] sm:$0xff] %v807
        %p810 = scmp.eq.s32.totalorder %s26, 7
        // Predicated region
        $region69: #{tpu_custom_call.1} parent=43 // pred_check
          %p811 = pneg %p810
        $region70: #{tpu_custom_call.1} parent=43 // pred_check_branch
          %813 = sbr.rel (%p811) target = $region72
        $region71: #{tpu_custom_call.1} parent=43 // pred_region
          %814 = vst [vmem:[#allocation13] sm:$0xff] %v805
          %815 = vst [vmem:[#allocation14] sm:$0xff] %v807
        $region72: #{tpu_custom_call.1} parent=43 // pred_fallthru
          _
        // Predicated region
        $region73: #{tpu_custom_call.1} parent=43 // pred_check
          %p816 = pneg %p170
        $region74: #{tpu_custom_call.1} parent=43 // pred_check_branch
          %818 = sbr.rel (%p816) target = $region76
        $region75: #{tpu_custom_call.1} parent=43 // pred_region
          %s820 = ssub.s32 128, 128
          %821 = vsyncadd [#allocation6], %s820
          %s823 = sshll.u32 [#allocation13], 4
          %s824 = int_to_ptr.vmem [resolvable:$true] %s823
          %826 = dma.vmem_to_hbm [thread:$0]  %s824, 128, %s6, [#allocation6]
        $region76: #{tpu_custom_call.1} parent=43 // pred_fallthru
          _
        // Predicated region
        $region77: #{tpu_custom_call.1} parent=43 // pred_check
          %p827 = pneg %p191
        $region78: #{tpu_custom_call.1} parent=43 // pred_check_branch
          %829 = sbr.rel (%p827) target = $region80
        $region79: #{tpu_custom_call.1} parent=43 // pred_region
          %s831 = ssub.s32 128, 128
          %832 = vsyncadd [#allocation15], %s831
          %s834 = sshll.u32 [#allocation14], 4
          %s835 = int_to_ptr.vmem [resolvable:$true] %s834
          %837 = dma.vmem_to_hbm [thread:$0]  %s835, 128, %s7, [#allocation15]
        $region80: #{tpu_custom_call.1} parent=43 // pred_fallthru
          _
        // Predicated region
        $region81: #{tpu_custom_call.1} parent=43 // pred_check
          %p838 = pneg %p170
        $region82: #{tpu_custom_call.1} parent=43 // pred_check_branch
          %840 = sbr.rel (%p838) target = $region84
        $region83: #{tpu_custom_call.1} parent=43 // pred_region
          %841 = dma.done [#allocation6], 128
        $region84: #{tpu_custom_call.1} parent=43 // pred_fallthru
          _
        // Predicated region
        $region85: #{tpu_custom_call.1} parent=43 // pred_check
          %p842 = pneg %p191
        $region86: #{tpu_custom_call.1} parent=43 // pred_check_branch
          %844 = sbr.rel (%p842) target = $region88
        $region87: #{tpu_custom_call.1} parent=43 // pred_region
          %845 = dma.done [#allocation15], 128
        $region88: #{tpu_custom_call.1} parent=43 // pred_fallthru
          _
      $region44: #{tpu_custom_call.1} parent=5 // pred_fallthru
        _
      %p846 = scmp.le.s32.totalorder 2, %s21
      // Predicated region
      $region89: #{tpu_custom_call.1} parent=5 // pred_check
        %p847 = pneg %p846
      $region90: #{tpu_custom_call.1} parent=5 // pred_check_branch
        %849 = sbr.rel (%p847) target = $region92
      $region91: #{tpu_custom_call.1} parent=5 // pred_region
        %s850 = ssub.s32 %s21, 2
      $region92: #{tpu_custom_call.1} parent=5 // pred_fallthru
        _
    $region6: #{tpu_custom_call.1} parent=1 // loop_footer
      %s25 = sadd.s32 1, %s21
    $region7: #{tpu_custom_call.1} parent=1 // loop_footer_branch
      %20 = sbr.rel target = $region3
    $region8: #{tpu_custom_call.1} parent=1 // loop_exit
      _
    %851 = vsyncpa [#allocation5], 1
    %s852 = scalar_lea.sflag [#allocation5], 1
    %853 = vsyncpa %s852, 1
    %854 = vsyncpa [#allocation8], 1
    %855 = vsyncpa [#allocation11], 1
    %856 = vsyncpa [#allocation6], 1
    %s857 = scalar_lea.sflag [#allocation6], 1
    %858 = vsyncpa %s857, 1
    %859 = vsyncpa [#allocation15], 1

</llo_original>
